<compile_context>
chip_gen: v5e
topology: v5e:2x2
jax: 0.10.0
libtpu: 0.0.40
codegen_flags: <defaults>
</compile_context>

<pallas_src>
import functools

import jax
import jax.numpy as jnp
from jax import lax
from jax.experimental import pallas as pl
from jax.experimental.pallas import tpu as pltpu

_BN_EPS = 1e-5


def _round_up(x, m):
    return (x + m - 1) // m * m


# ---------- Fast path: matmul + BN stats + normalize + ReLU in one kernel ----
def _fused_kernel(inv_m, p_ref, w_ref, gb_ref, o_ref):
    # Whole complex conv (im2col form) in one MXU matmul, f32 accumulation.
    y = jnp.dot(p_ref[...], w_ref[...], preferred_element_type=jnp.float32)   # (M, 2C)
    # Training-mode BatchNorm batch stats (padded rows are zero and m-neutral
    # because the conv bias is folded out; inv_m uses the true row count).
    mean = jnp.sum(y, axis=0, keepdims=True) * inv_m                          # (1, 2C)
    ex2 = jnp.sum(y * y, axis=0, keepdims=True) * inv_m                       # (1, 2C)
    var = ex2 - mean * mean                                                   # biased var
    inv_std = lax.rsqrt(var + _BN_EPS)                                        # EUP
    scale = gb_ref[0:1, :] * inv_std                                          # gamma * rsqrt
    shift = gb_ref[1:2, :] - mean * scale                                     # beta - mean*scale
    o_ref[...] = jnp.maximum(y * scale + shift, 0.0)


# ------------------- Pass 1: fused complex matmul + BN partials --------------
def _matmul_stats_kernel(p_ref, w_ref, y_ref, stats_ref):
    # One MXU matmul implements the whole complex conv (im2col form).
    y = jnp.dot(p_ref[...], w_ref[...], preferred_element_type=jnp.float32)   # (TM, 2C) f32
    y_ref[...] = y
    # Per-channel partial sums for training-mode BatchNorm statistics.
    s = jnp.sum(y, axis=0, keepdims=True)        # (1, 2C)
    ss = jnp.sum(y * y, axis=0, keepdims=True)   # (1, 2C)
    stats_ref[...] = jnp.concatenate([s, ss], axis=0).reshape(1, 2, y.shape[-1])


# ------------------- Pass 2: normalize + affine + ReLU (fused FMA) -----------
def _bn_relu_kernel(y_ref, ss_ref, o_ref):
    scale = ss_ref[0:1, :]
    shift = ss_ref[1:2, :]
    o_ref[...] = jnp.maximum(y_ref[...] * scale + shift, 0.0)


# ------------------------------ host wrapper ----------------------------------
def _im2col(x_nchw, k, stride, padding, dilation):
    """x_nchw: (N, C, H, W) -> patches (N*OH*OW, C*k*k), column order (c, kh, kw)."""
    n, c, h, w = x_nchw.shape
    oh = (h + 2 * padding - dilation * (k - 1) - 1) // stride + 1
    ow = (w + 2 * padding - dilation * (k - 1) - 1) // stride + 1
    xp = jnp.pad(x_nchw, ((0, 0), (0, 0), (padding, padding), (padding, padding)))
    cols = []
    for kh in range(k):
        for kw in range(k):
            sl = xp[:, :,
                    kh * dilation: kh * dilation + stride * (oh - 1) + 1: stride,
                    kw * dilation: kw * dilation + stride * (ow - 1) + 1: stride]
            cols.append(sl)                                   # (N, C, OH, OW)
    patches = jnp.stack(cols, axis=2)                         # (N, C, k*k, OH, OW)
    patches = patches.transpose(0, 3, 4, 1, 2)                # (N, OH, OW, C, k*k)
    return patches.reshape(n * oh * ow, c * k * k), oh, ow


@functools.partial(jax.jit,
                   static_argnames=("k_size", "stride", "padding", "dilation", "block_rows"))
def complex_conv_pool(x, params, *, k_size, stride, padding, dilation, block_rows=512):
    """x: (N, C_in, H, W, 2) float32.  Returns (N, C_out, OH, OW, 2) float32."""
    n, c_in, h, w, _ = x.shape
    w_real = params["w_real"]            # (C_out, C_in, k, k)
    w_imag = params["w_imag"]
    c_out = w_real.shape[0]
    k_dim = c_in * k_size * k_size
    two_k = 2 * k_dim
    two_c = 2 * c_out

    # --- glue: single im2col over [real | imag] channels -> P = [pr | pi] ---
    x_ri = jnp.concatenate([x[..., 0], x[..., 1]], axis=1)     # (N, 2*C_in, H, W)
    p, oh, ow = _im2col(x_ri, k_size, stride, padding, dilation)   # (M, 2K)
    m = p.shape[0]

    # Fused complex-product weight  W = [[wr, wi], [-wi, wr]]  (2K, 2C):
    #   Y[:, :C] = pr@wr - pi@wi = y_real_pre,  Y[:, C:] = pr@wi + pi@wr = y_imag_pre
    wr = w_real.reshape(c_out, k_dim).T
    wi = w_imag.reshape(c_out, k_dim).T
    w_cat = jnp.concatenate(
        [jnp.concatenate([wr, wi], axis=1),
         jnp.concatenate([-wi, wr], axis=1)], axis=0)           # (2K, 2C)

    # NOTE: conv biases are intentionally NOT added here: a per-channel constant
    # cancels exactly under the BatchNorm mean subtraction (also keeps the
    # zero-padded rows below stats-neutral).

    # bf16 matmul operands (MXU-native, halves HBM->VMEM bytes); accumulate f32.
    p_bf = p.astype(jnp.bfloat16)
    w_bf = w_cat.astype(jnp.bfloat16)

    # gamma / beta packed as a single (2, 2C) block: row 0 = gamma, row 1 = beta.
    gamma = jnp.concatenate([params["bn_gamma_real"], params["bn_gamma_imag"]])
    beta = jnp.concatenate([params["bn_beta_real"], params["bn_beta_imag"]])
    gb = jnp.stack([gamma, beta], axis=0).astype(jnp.float32)   # (2, 2C)

    # --- M tiling (fits well under every generation's scoped VMEM) ---
    tm = min(block_rows, _round_up(m, 8))
    m_pad = _round_up(m, tm)
    if m_pad != m:
        p_bf = jnp.pad(p_bf, ((0, m_pad - m), (0, 0)))
    num_tiles = m_pad // tm

    if num_tiles == 1:
        # ---------------- fully fused single-tile path ----------------------
        out_flat = pl.pallas_call(
            functools.partial(_fused_kernel, float(1.0 / m)),
            grid=(1,),
            in_specs=[
                pl.BlockSpec((m_pad, two_k), lambda i: (0, 0)),
                pl.BlockSpec((two_k, two_c), lambda i: (0, 0)),
                pl.BlockSpec((2, two_c), lambda i: (0, 0)),
            ],
            out_specs=pl.BlockSpec((m_pad, two_c), lambda i: (0, 0)),
            out_shape=jax.ShapeDtypeStruct((m_pad, two_c), jnp.float32),
            compiler_params=pltpu.CompilerParams(
                dimension_semantics=("arbitrary",),
                vmem_limit_bytes=32 * 1024 * 1024,
            ),
        )(p_bf, w_bf, gb)
    else:
        # ---------------- general two-pass path ------------------------------
        cparams = pltpu.CompilerParams(
            dimension_semantics=("parallel",),        # shard M tiles across TCs (v7x)
            vmem_limit_bytes=32 * 1024 * 1024,        # explicit; far above actual use
        )

        # pass 1: fused complex matmul + per-tile BN partial sums
        y, stats = pl.pallas_call(
            _matmul_stats_kernel,
            grid=(num_tiles,),
            in_specs=[
                pl.BlockSpec((tm, two_k), lambda i: (i, 0)),        # patch tile (pipelined)
                pl.BlockSpec((two_k, two_c), lambda i: (0, 0)),     # weights, resident
            ],
            out_specs=(
                pl.BlockSpec((tm, two_c), lambda i: (i, 0)),        # lane-dense Y tile
                pl.BlockSpec((1, 2, two_c), lambda i: (i, 0, 0)),   # per-tile [sum; sumsq]
            ),
            out_shape=(
                jax.ShapeDtypeStruct((m_pad, two_c), jnp.float32),
                jax.ShapeDtypeStruct((num_tiles, 2, two_c), jnp.float32),
            ),
            compiler_params=cparams,
        )(p_bf, w_bf)

        # tiny host fold: global batch stats + gamma/beta fold (2*2C numbers)
        tot = jnp.sum(stats, axis=0)                 # (2, 2C): [sum; sum of squares]
        mean = tot[0] / m
        var = tot[1] / m - mean * mean               # biased variance (training-mode BN)
        inv_std = lax.rsqrt(var + _BN_EPS)
        scale = gamma * inv_std
        shift = beta - mean * scale
        scale_shift = jnp.stack([scale, shift], axis=0).astype(jnp.float32)   # (2, 2C)

        # pass 2: fused normalize + affine + ReLU over lane-dense (M, 2C)
        out_flat = pl.pallas_call(
            _bn_relu_kernel,
            grid=(num_tiles,),
            in_specs=[
                pl.BlockSpec((tm, two_c), lambda i: (i, 0)),
                pl.BlockSpec((2, two_c), lambda i: (0, 0)),
            ],
            out_specs=pl.BlockSpec((tm, two_c), lambda i: (i, 0)),
            out_shape=jax.ShapeDtypeStruct((m_pad, two_c), jnp.float32),
            compiler_params=cparams,
        )(y, scale_shift)

    # --- glue: back to PyTorch NCHW + complex-last layout ---
    out_flat = out_flat[:m]
    out_r = out_flat[:, :c_out].reshape(n, oh, ow, c_out).transpose(0, 3, 1, 2)
    out_i = out_flat[:, c_out:].reshape(n, oh, ow, c_out).transpose(0, 3, 1, 2)
    return jnp.stack((out_r, out_i), axis=-1)


# ------------------------------ reference (plain JAX) -------------------------
def _ref_forward(x, params, *, k_size, stride, padding, dilation):
    def conv(xr, w, b):
        out = jax.lax.conv_general_dilated(
            xr, w, window_strides=(stride, stride),
            padding=[(padding, padding), (padding, padding)],
            rhs_dilation=(dilation, dilation),
            dimension_numbers=("NCHW", "OIHW", "NCHW"))
        return out + b[None, :, None, None]

    xr, xi = x[..., 0], x[..., 1]
    y_real = conv(xr, params["w_real"], params["b_real"]) - conv(xi, params["w_imag"], params["b_imag"])
    y_imag = conv(xi, params["w_real"], params["b_real"]) + conv(xr, params["w_imag"], params["b_imag"])

    def bn_relu(y, gamma, beta):
        mean = jnp.mean(y, axis=(0, 2, 3), keepdims=True)
        var = jnp.mean((y - mean) ** 2, axis=(0, 2, 3), keepdims=True)
        z = (y - mean) / jnp.sqrt(var + 1e-5)
        z = z * gamma[None, :, None, None] + beta[None, :, None, None]
        return jnp.maximum(z, 0.0)

    out_r = bn_relu(y_real, params["bn_gamma_real"], params["bn_beta_real"])
    out_i = bn_relu(y_imag, params["bn_gamma_imag"], params["bn_beta_imag"])
    return jnp.stack((out_r, out_i), axis=-1)


# ---------------------------------- main ---------------------------------------
if __name__ == "__main__":
    # ComplexConvPool(act_fn=ReLU, c_in=4, c_out=8, k_size=3, stride=2,
    #                 padding=1, dilation=1, use_bias=True, use_bn=True)
    N, C_IN, C_OUT, H, W = 2, 4, 8, 16, 16
    K, STRIDE, PAD, DIL = 3, 2, 1, 1

    key = jax.random.PRNGKey(0)
    k_x, k_wr, k_wi, k_br, k_bi = jax.random.split(key, 5)

    x = jax.random.normal(k_x, (N, C_IN, H, W, 2), dtype=jnp.float32)

    fan_in = C_IN * K * K
    scale = 1.0 / jnp.sqrt(jnp.float32(fan_in))
    params = {
        "w_real": jax.random.uniform(k_wr, (C_OUT, C_IN, K, K), jnp.float32, -scale, scale),
        "w_imag": jax.random.uniform(k_wi, (C_OUT, C_IN, K, K), jnp.float32, -scale, scale),
        "b_real": jax.random.uniform(k_br, (C_OUT,), jnp.float32, -scale, scale),
        "b_imag": jax.random.uniform(k_bi, (C_OUT,), jnp.float32, -scale, scale),
        # BatchNorm affine params at PyTorch init values (gamma=1, beta=0).
        "bn_gamma_real": jnp.ones((C_OUT,), jnp.float32),
        "bn_beta_real": jnp.zeros((C_OUT,), jnp.float32),
        "bn_gamma_imag": jnp.ones((C_OUT,), jnp.float32),
        "bn_beta_imag": jnp.zeros((C_OUT,), jnp.float32),
    }

    out = complex_conv_pool(x, params, k_size=K, stride=STRIDE, padding=PAD, dilation=DIL)
    out = jax.block_until_ready(out)

    ref = _ref_forward(x, params, k_size=K, stride=STRIDE, padding=PAD, dilation=DIL)
    OH = (H + 2 * PAD - K) // STRIDE + 1
    OW = (W + 2 * PAD - K) // STRIDE + 1
    assert out.shape == ref.shape == (N, C_OUT, OH, OW, 2)
    # bf16 matmul operands -> slightly looser tolerance than the f32 reference.
    assert bool(jnp.allclose(out, ref, atol=2e-2, rtol=2e-2)), "mismatch vs reference"

    print("KERNEL_OK")
</pallas_src>

<mosaic_0001>
module attributes {stable_mosaic.version = 11 : i64} {
  func.func @_fused_kernel(%arg0: i32, %arg1: memref<128x72xbf16, #tpu.memory_space<vmem>>, %arg2: memref<72x16xbf16, #tpu.memory_space<vmem>>, %arg3: memref<2x16xf32, #tpu.memory_space<vmem>>, %arg4: memref<128x16xf32, #tpu.memory_space<vmem>>) attributes {dimension_semantics = [#tpu.dimension_semantics<arbitrary>], iteration_bounds = array<i64: 1>, scalar_prefetch = 0 : i64, scratch_operands = 0 : i64, tpu.core_type = #tpu.core_type<tc>, window_params = [{pipeline_mode = #tpu.pipeline_mode<synchronous>, transform_indices = @transform_0, window_bounds = array<i64: 128, 72>}, {pipeline_mode = #tpu.pipeline_mode<synchronous>, transform_indices = @transform_1, window_bounds = array<i64: 72, 16>}, {pipeline_mode = #tpu.pipeline_mode<synchronous>, transform_indices = @transform_2, window_bounds = array<i64: 2, 16>}, {pipeline_mode = #tpu.pipeline_mode<synchronous>, transform_indices = @transform_3, window_bounds = array<i64: 128, 16>}]} {
    %c0 = arith.constant 0 : index
    %c0_0 = arith.constant 0 : index
    %0 = vector.load %arg1[%c0, %c0_0] : memref<128x72xbf16, #tpu.memory_space<vmem>>, vector<128x72xbf16>
    %c0_1 = arith.constant 0 : index
    %c0_2 = arith.constant 0 : index
    %1 = vector.load %arg2[%c0_1, %c0_2] : memref<72x16xbf16, #tpu.memory_space<vmem>>, vector<72x16xbf16>
    %cst = arith.constant dense<0.000000e+00> : vector<128x16xf32>
    %2 = tpu.matmul %0, %1, %cst {dimension_numbers = #tpu.dot_dimension_numbers<[1], [0], [0], [1], [0, 0, 1, 1], [], []>} : vector<128x72xbf16>, vector<72x16xbf16>, vector<128x16xf32> -> vector<128x16xf32>
    %cst_3 = arith.constant dense<0.000000e+00> : vector<16xf32>
    %3 = vector.multi_reduction <add>, %2, %cst_3 [0] : vector<128x16xf32> to vector<16xf32>
    %4 = vector.shape_cast %3 : vector<16xf32> to vector<1x16xf32>
    %cst_4 = arith.constant 7.812500e-03 : f32
    %5 = vector.broadcast %cst_4 : f32 to vector<1x16xf32>
    %6 = arith.mulf %4, %5 : vector<1x16xf32>
    %7 = arith.mulf %2, %2 : vector<128x16xf32>
    %cst_5 = arith.constant dense<0.000000e+00> : vector<16xf32>
    %8 = vector.multi_reduction <add>, %7, %cst_5 [0] : vector<128x16xf32> to vector<16xf32>
    %9 = vector.shape_cast %8 : vector<16xf32> to vector<1x16xf32>
    %cst_6 = arith.constant 7.812500e-03 : f32
    %10 = vector.broadcast %cst_6 : f32 to vector<1x16xf32>
    %11 = arith.mulf %9, %10 : vector<1x16xf32>
    %12 = arith.mulf %6, %6 : vector<1x16xf32>
    %13 = arith.subf %11, %12 : vector<1x16xf32>
    %cst_7 = arith.constant 9.99999974E-6 : f32
    %14 = vector.broadcast %cst_7 : f32 to vector<1x16xf32>
    %15 = arith.addf %13, %14 : vector<1x16xf32>
    %16 = math.rsqrt %15 : vector<1x16xf32>
    %c0_8 = arith.constant 0 : index
    %c0_9 = arith.constant 0 : index
    %17 = vector.load %arg3[%c0_8, %c0_9] : memref<2x16xf32, #tpu.memory_space<vmem>>, vector<1x16xf32>
    %18 = arith.mulf %17, %16 : vector<1x16xf32>
    %c1 = arith.constant 1 : index
    %c0_10 = arith.constant 0 : index
    %19 = vector.load %arg3[%c1, %c0_10] : memref<2x16xf32, #tpu.memory_space<vmem>>, vector<1x16xf32>
    %20 = arith.mulf %6, %18 : vector<1x16xf32>
    %21 = arith.subf %19, %20 : vector<1x16xf32>
    %22 = vector.broadcast %18 : vector<1x16xf32> to vector<128x16xf32>
    %23 = arith.mulf %2, %22 : vector<128x16xf32>
    %24 = vector.broadcast %21 : vector<1x16xf32> to vector<128x16xf32>
    %25 = arith.addf %23, %24 : vector<128x16xf32>
    %cst_11 = arith.constant 0.000000e+00 : f32
    %26 = vector.broadcast %cst_11 : f32 to vector<128x16xf32>
    %27 = arith.maximumf %25, %26 : vector<128x16xf32>
    %c0_12 = arith.constant 0 : index
    %c0_13 = arith.constant 0 : index
    %28 = vector.load %arg4[%c0_12, %c0_13] : memref<128x16xf32, #tpu.memory_space<vmem>>, vector<128x16xf32>
    tpu.vector_store %arg4[%c0_12, %c0_13], %27 {strides = array<i32>} : memref<128x16xf32, #tpu.memory_space<vmem>>, vector<128x16xf32>,
    return
  }
  func.func @transform_0(%arg0: i32) -> (i32, i32) {
    %c0_i32 = arith.constant 0 : i32
    %c0_i32_0 = arith.constant 0 : i32
    %c0_i32_1 = arith.constant 0 : i32
    return %c0_i32, %c0_i32_0 : i32, i32
  }
  func.func @transform_1(%arg0: i32) -> (i32, i32) {
    %c0_i32 = arith.constant 0 : i32
    %c0_i32_0 = arith.constant 0 : i32
    %c0_i32_1 = arith.constant 0 : i32
    return %c0_i32, %c0_i32_0 : i32, i32
  }
  func.func @transform_2(%arg0: i32) -> (i32, i32) {
    %c0_i32 = arith.constant 0 : i32
    %c0_i32_0 = arith.constant 0 : i32
    %c0_i32_1 = arith.constant 0 : i32
    return %c0_i32, %c0_i32_0 : i32, i32
  }
  func.func @transform_3(%arg0: i32) -> (i32, i32) {
    %c0_i32 = arith.constant 0 : i32
    %c0_i32_0 = arith.constant 0 : i32
    %c0_i32_1 = arith.constant 0 : i32
    return %c0_i32, %c0_i32_0 : i32, i32
  }
}

</mosaic_0001>

<llo_original>
// kernel: complex_conv_pool.1
$region0: #{complex_conv_pool.1}
  #allocation0 [shape = 'u32[]', space=smem, size = 0x4, offset = 0x4, fixed_abs, tag = 'smem constant byte address 0x4 - core index']
  #allocation1 [shape = 'u32[72,128]{1,0:T(1,128)}', space=vmem, size = 0x9000, scoped, tag = 'internal scratch']
  %s0 = inlined_call_operand.vmem [shape: bf16[128,72], index: 0, kind: input, shape index: {}]
  %s1 = inlined_call_operand.vmem [shape: bf16[72,16], index: 1, kind: input, shape index: {}]
  %s2 = inlined_call_operand.vmem [shape: f32[2,16], index: 2, kind: input, shape index: {}]
  %s3 = inlined_call_operand.vmem [shape: f32[128,16], index: 3, kind: output, shape index: {}]
  %s4 = sld [smem:[#allocation0]]
  $region22: #{complex_conv_pool.1} parent=0
    _
  %s6 = ssub.s32 1, %s4
  %s7 = scalar_select 0, %s6, %s4
  // Predicated region
  $region2: #{complex_conv_pool.1} parent=0 // pred_check
    _
  $region3: #{complex_conv_pool.1} parent=0 // pred_check_branch
    %9 = sbr.rel (0) target = $region5
  $region4: #{complex_conv_pool.1} parent=0 // pred_region
    _
  $region5: #{complex_conv_pool.1} parent=0 // pred_fallthru
    _
  // Predicated region
  $region6: #{complex_conv_pool.1} parent=0 // pred_check
    _
  $region7: #{complex_conv_pool.1} parent=0 // pred_check_branch
    %11 = sbr.rel (0) target = $region9
  $region8: #{complex_conv_pool.1} parent=0 // pred_region
    _
  $region9: #{complex_conv_pool.1} parent=0 // pred_fallthru
    _
  // Predicated region
  $region10: #{complex_conv_pool.1} parent=0 // pred_check
    _
  $region11: #{complex_conv_pool.1} parent=0 // pred_check_branch
    %13 = sbr.rel (0) target = $region13
  $region12: #{complex_conv_pool.1} parent=0 // pred_region
    _
  $region13: #{complex_conv_pool.1} parent=0 // pred_fallthru
    _
  %v15 = vld [vmem:[%s0] sm:$0xf]
  %v16 = vld [vmem:[%s0 + $0x4] sm:$0xf]
  %v17 = vld [vmem:[%s0 + $0x8] sm:$0xf]
  %v18 = vld [vmem:[%s0 + $0xc] sm:$0xf]
  %v19 = vld [vmem:[%s0 + $0x10] sm:$0xf]
  %v20 = vld [vmem:[%s0 + $0x14] sm:$0xf]
  %v21 = vld [vmem:[%s0 + $0x18] sm:$0xf]
  %v22 = vld [vmem:[%s0 + $0x1c] sm:$0xf]
  %v23 = vld [vmem:[%s0 + $0x20] sm:$0xf]
  %v24 = vld [vmem:[%s0 + $0x24] sm:$0xf]
  %v25 = vld [vmem:[%s0 + $0x28] sm:$0xf]
  %v26 = vld [vmem:[%s0 + $0x2c] sm:$0xf]
  %v27 = vld [vmem:[%s0 + $0x30] sm:$0xf]
  %v28 = vld [vmem:[%s0 + $0x34] sm:$0xf]
  %v29 = vld [vmem:[%s0 + $0x38] sm:$0xf]
  %v30 = vld [vmem:[%s0 + $0x3c] sm:$0xf]
  %v31 = vld [vmem:[%s1] sm:$0xf]
  %v32 = vld [vmem:[%s1 + $0x4] sm:$0xf]
  %v33 = vld [vmem:[%s1 + $0x8] sm:$0xf]
  %v34 = vld [vmem:[%s1 + $0xc] sm:$0xf]
  %v35 = vld [vmem:[%s1 + $0x10] sm:$0xf]
  %v36 = vld [vmem:[%s1 + $0x14] sm:$0xf]
  %v37 = vld [vmem:[%s1 + $0x18] sm:$0xf]
  %v38 = vld [vmem:[%s1 + $0x1c] sm:$0xf]
  %v39 = vld [vmem:[%s1 + $0x20] sm:$0xf]
  %v56 = vunpack.c.l.b16 %v15
  %v57 = vunpack.c.l.b16 %v16
  %v58 = vunpack.c.l.b16 %v17
  %v59 = vunpack.c.l.b16 %v18
  %v60 = vunpack.c.l.b16 %v19
  %v61 = vunpack.c.l.b16 %v20
  %v62 = vunpack.c.l.b16 %v21
  %v63 = vunpack.c.l.b16 %v22
  %v64 = vunpack.c.l.b16 %v23
  %v65 = vunpack.c.l.b16 %v24
  %v66 = vunpack.c.l.b16 %v25
  %v67 = vunpack.c.l.b16 %v26
  %v68 = vunpack.c.l.b16 %v27
  %v69 = vunpack.c.l.b16 %v28
  %v70 = vunpack.c.l.b16 %v29
  %v71 = vunpack.c.l.b16 %v30
  %v72 = vpack.c.b16 %v57, %v56
  %v73 = vpack.c.b16 %v59, %v58
  %v74 = vpack.c.b16 %v61, %v60
  %v75 = vpack.c.b16 %v63, %v62
  %v76 = vpack.c.b16 %v65, %v64
  %v77 = vpack.c.b16 %v67, %v66
  %v78 = vpack.c.b16 %v69, %v68
  %v79 = vpack.c.b16 %v71, %v70
  %v89 = vunpack.c.l.b16 %v31
  %v90 = vunpack.c.l.b16 %v32
  %v91 = vunpack.c.l.b16 %v33
  %v92 = vunpack.c.l.b16 %v34
  %v93 = vunpack.c.l.b16 %v35
  %v94 = vunpack.c.l.b16 %v36
  %v95 = vunpack.c.l.b16 %v37
  %v96 = vunpack.c.l.b16 %v38
  %v97 = vunpack.c.l.b16 %v39
  %v98 = vpack.c.b16 %v90, %v89
  %v99 = vpack.c.b16 %v92, %v91
  %v100 = vpack.c.b16 %v94, %v93
  %v101 = vpack.c.b16 %v96, %v95
  %v102 = vpack.c.b16 %v97, %v97
  %vm107 = vcmask 588800
  %v109 = vsel %vm107, %v72, 0
  %v112 = vsel %vm107, %v73, 0
  %v115 = vsel %vm107, %v74, 0
  %v118 = vsel %vm107, %v75, 0
  %v121 = vsel %vm107, %v76, 0
  %v124 = vsel %vm107, %v77, 0
  %v127 = vsel %vm107, %v78, 0
  %v130 = vsel %vm107, %v79, 0
  %vm132 = vcmask 1043456
  %v134 = vsel %vm132, %v102, 0
  %136 = vmatpush.bf16.msra.mxu0 0
  %137 = vmatpush.bf16.msra.mxu0 0
  %138 = vmatpush.bf16.msra.mxu0 0
  %139 = vmatpush.bf16.msra.mxu0 %v134
  %140 = vmatpush.bf16.msra.mxu0 %v101
  %141 = vmatpush.bf16.msra.mxu0 %v100
  %142 = vmatpush.bf16.msra.mxu0 %v99
  %143 = vmatpush.bf16.msra.mxu0 %v98
  %144 = vmatmul.bf16.gmra.mxu0 %v109
  %v145 = vpop.f32.mrf.mxu0
  %v146 = vadd.f32 0.0, %v145
  %v147 = vpop.f32.mrf.mxu0
  %v148 = vadd.f32 0.0, %v147
  %149 = vmatmul.bf16.gmra.mxu0 %v112
  %v150 = vpop.f32.mrf.mxu0
  %v151 = vadd.f32 0.0, %v150
  %v152 = vpop.f32.mrf.mxu0
  %v153 = vadd.f32 0.0, %v152
  %154 = vmatmul.bf16.gmra.mxu0 %v115
  %v155 = vpop.f32.mrf.mxu0
  %v156 = vadd.f32 0.0, %v155
  %v157 = vpop.f32.mrf.mxu0
  %v158 = vadd.f32 0.0, %v157
  %159 = vmatmul.bf16.gmra.mxu0 %v118
  %v160 = vpop.f32.mrf.mxu0
  %v161 = vadd.f32 0.0, %v160
  %v162 = vpop.f32.mrf.mxu0
  %v163 = vadd.f32 0.0, %v162
  %164 = vmatmul.bf16.gmra.mxu0 %v121
  %v165 = vpop.f32.mrf.mxu0
  %v166 = vadd.f32 0.0, %v165
  %v167 = vpop.f32.mrf.mxu0
  %v168 = vadd.f32 0.0, %v167
  %169 = vmatmul.bf16.gmra.mxu0 %v124
  %v170 = vpop.f32.mrf.mxu0
  %v171 = vadd.f32 0.0, %v170
  %v172 = vpop.f32.mrf.mxu0
  %v173 = vadd.f32 0.0, %v172
  %174 = vmatmul.bf16.gmra.mxu0 %v127
  %v175 = vpop.f32.mrf.mxu0
  %v176 = vadd.f32 0.0, %v175
  %v177 = vpop.f32.mrf.mxu0
  %v178 = vadd.f32 0.0, %v177
  %179 = vmatmul.bf16.gmra.mxu0 %v130
  %v180 = vpop.f32.mrf.mxu0
  %v181 = vadd.f32 0.0, %v180
  %v182 = vpop.f32.mrf.mxu0
  %v183 = vadd.f32 0.0, %v182
  %184 = vdwg.mxu0
  %vm185 = vcmask 130048
  %v186 = vsel %vm185, %v146, 0.0
  %v187 = vsel %vm185, %v148, 0.0
  %v188 = vadd.f32 %v186, %v187
  %v189 = vsel %vm185, %v151, 0.0
  %v190 = vadd.f32 %v188, %v189
  %v191 = vsel %vm185, %v153, 0.0
  %v192 = vadd.f32 %v190, %v191
  %v193 = vsel %vm185, %v156, 0.0
  %v194 = vadd.f32 %v192, %v193
  %v195 = vsel %vm185, %v158, 0.0
  %v196 = vadd.f32 %v194, %v195
  %v197 = vsel %vm185, %v161, 0.0
  %v198 = vadd.f32 %v196, %v197
  %v199 = vsel %vm185, %v163, 0.0
  %v200 = vadd.f32 %v198, %v199
  %v201 = vsel %vm185, %v166, 0.0
  %v202 = vadd.f32 %v200, %v201
  %v203 = vsel %vm185, %v168, 0.0
  %v204 = vadd.f32 %v202, %v203
  %v205 = vsel %vm185, %v171, 0.0
  %v206 = vadd.f32 %v204, %v205
  %v207 = vsel %vm185, %v173, 0.0
  %v208 = vadd.f32 %v206, %v207
  %v209 = vsel %vm185, %v176, 0.0
  %v210 = vadd.f32 %v208, %v209
  %v211 = vsel %vm185, %v178, 0.0
  %v212 = vadd.f32 %v210, %v211
  %v213 = vsel %vm185, %v181, 0.0
  %v214 = vadd.f32 %v212, %v213
  %v215 = vsel %vm185, %v183, 0.0
  %v216 = vadd.f32 %v214, %v215
  %v217 = vrot.slane %v216, 4
  %v218 = vadd.f32 %v216, %v217
  %v219 = vrot.slane %v218, 2
  %v220 = vadd.f32 %v218, %v219
  %v221 = vrot.slane %v220, 1
  %v222 = vadd.f32 %v220, %v221
  %v223 = vmul.f32 %v222, 0.0078125
  %v224 = vmul.f32 %v146, %v146
  %v225 = vmul.f32 %v148, %v148
  %v226 = vmul.f32 %v151, %v151
  %v227 = vmul.f32 %v153, %v153
  %v228 = vmul.f32 %v156, %v156
  %v229 = vmul.f32 %v158, %v158
  %v230 = vmul.f32 %v161, %v161
  %v231 = vmul.f32 %v163, %v163
  %v232 = vmul.f32 %v166, %v166
  %v233 = vmul.f32 %v168, %v168
  %v234 = vmul.f32 %v171, %v171
  %v235 = vmul.f32 %v173, %v173
  %v236 = vmul.f32 %v176, %v176
  %v237 = vmul.f32 %v178, %v178
  %v238 = vmul.f32 %v181, %v181
  %v239 = vmul.f32 %v183, %v183
  %v240 = vsel %vm185, %v224, 0.0
  %v241 = vsel %vm185, %v225, 0.0
  %v242 = vadd.f32 %v240, %v241
  %v243 = vsel %vm185, %v226, 0.0
  %v244 = vadd.f32 %v242, %v243
  %v245 = vsel %vm185, %v227, 0.0
  %v246 = vadd.f32 %v244, %v245
  %v247 = vsel %vm185, %v228, 0.0
  %v248 = vadd.f32 %v246, %v247
  %v249 = vsel %vm185, %v229, 0.0
  %v250 = vadd.f32 %v248, %v249
  %v251 = vsel %vm185, %v230, 0.0
  %v252 = vadd.f32 %v250, %v251
  %v253 = vsel %vm185, %v231, 0.0
  %v254 = vadd.f32 %v252, %v253
  %v255 = vsel %vm185, %v232, 0.0
  %v256 = vadd.f32 %v254, %v255
  %v257 = vsel %vm185, %v233, 0.0
  %v258 = vadd.f32 %v256, %v257
  %v259 = vsel %vm185, %v234, 0.0
  %v260 = vadd.f32 %v258, %v259
  %v261 = vsel %vm185, %v235, 0.0
  %v262 = vadd.f32 %v260, %v261
  %v263 = vsel %vm185, %v236, 0.0
  %v264 = vadd.f32 %v262, %v263
  %v265 = vsel %vm185, %v237, 0.0
  %v266 = vadd.f32 %v264, %v265
  %v267 = vsel %vm185, %v238, 0.0
  %v268 = vadd.f32 %v266, %v267
  %v269 = vsel %vm185, %v239, 0.0
  %v270 = vadd.f32 %v268, %v269
  %v271 = vrot.slane %v270, 4
  %v272 = vadd.f32 %v270, %v271
  %v273 = vrot.slane %v272, 2
  %v274 = vadd.f32 %v272, %v273
  %v275 = vrot.slane %v274, 1
  %v276 = vadd.f32 %v274, %v275
  %v277 = vmul.f32 %v276, 0.0078125
  %v278 = vmul.f32 %v223, %v223
  %v279 = vsub.f32 %v277, %v278
  %v280 = vadd.f32 %v279, 1e-05
  %v281 = vrsqrt.pop %v280
  %v282 = vmul.f32 %v281, %v280
  %v283 = vmul.f32 %v282, %v281
  %v284 = vmul.f32 0.5, %v283
  %v285 = vsub.f32 1.5, %v284
  %v286 = vmul.f32 %v281, %v285
  %vm287 = vweird.f32 %v280
  %vm288 = vweird.f32 %v281
  %vm289 = vmor %vm287, %vm288
  %v290 = vsel %vm289, %v281, %v286
  %v291 = vld [vmem:[%s2] sm:$0x1]
  %v292 = vmul.f32 %v291, %v290
  %v293 = vld [vmem:[%s2 + $0x1] sm:$0x1]
  %v294 = vmul.f32 %v223, %v292
  %v295 = vsub.f32 %v293, %v294
  %v296 = vperm.slane %v292, 0
  %v297 = vmul.f32 %v146, %v296
  %v298 = vmul.f32 %v148, %v296
  %v299 = vmul.f32 %v151, %v296
  %v300 = vmul.f32 %v153, %v296
  %v301 = vmul.f32 %v156, %v296
  %v302 = vmul.f32 %v158, %v296
  %v303 = vmul.f32 %v161, %v296
  %v304 = vmul.f32 %v163, %v296
  %v305 = vmul.f32 %v166, %v296
  %v306 = vmul.f32 %v168, %v296
  %v307 = vmul.f32 %v171, %v296
  %v308 = vmul.f32 %v173, %v296
  %v309 = vmul.f32 %v176, %v296
  %v310 = vmul.f32 %v178, %v296
  %v311 = vmul.f32 %v181, %v296
  %v312 = vmul.f32 %v183, %v296
  %v313 = vperm.slane %v295, 0
  %v314 = vadd.f32 %v297, %v313
  %v315 = vadd.f32 %v298, %v313
  %v316 = vadd.f32 %v299, %v313
  %v317 = vadd.f32 %v300, %v313
  %v318 = vadd.f32 %v301, %v313
  %v319 = vadd.f32 %v302, %v313
  %v320 = vadd.f32 %v303, %v313
  %v321 = vadd.f32 %v304, %v313
  %v322 = vadd.f32 %v305, %v313
  %v323 = vadd.f32 %v306, %v313
  %v324 = vadd.f32 %v307, %v313
  %v325 = vadd.f32 %v308, %v313
  %v326 = vadd.f32 %v309, %v313
  %v327 = vadd.f32 %v310, %v313
  %v328 = vadd.f32 %v311, %v313
  %v329 = vadd.f32 %v312, %v313
  %v330 = vmax.f32 %v314, 0.0
  %v331 = vmax.f32 %v315, 0.0
  %v332 = vmax.f32 %v316, 0.0
  %v333 = vmax.f32 %v317, 0.0
  %v334 = vmax.f32 %v318, 0.0
  %v335 = vmax.f32 %v319, 0.0
  %v336 = vmax.f32 %v320, 0.0
  %v337 = vmax.f32 %v321, 0.0
  %v338 = vmax.f32 %v322, 0.0
  %v339 = vmax.f32 %v323, 0.0
  %v340 = vmax.f32 %v324, 0.0
  %v341 = vmax.f32 %v325, 0.0
  %v342 = vmax.f32 %v326, 0.0
  %v343 = vmax.f32 %v327, 0.0
  %v344 = vmax.f32 %v328, 0.0
  %v345 = vmax.f32 %v329, 0.0
  %346 = vst.msk [vmem:[%s3] sm:$0xff] %vm185, %v330
  %347 = vst.msk [vmem:[%s3 + $0x8] sm:$0xff] %vm185, %v331
  %348 = vst.msk [vmem:[%s3 + $0x10] sm:$0xff] %vm185, %v332
  %349 = vst.msk [vmem:[%s3 + $0x18] sm:$0xff] %vm185, %v333
  %350 = vst.msk [vmem:[%s3 + $0x20] sm:$0xff] %vm185, %v334
  %351 = vst.msk [vmem:[%s3 + $0x28] sm:$0xff] %vm185, %v335
  %352 = vst.msk [vmem:[%s3 + $0x30] sm:$0xff] %vm185, %v336
  %353 = vst.msk [vmem:[%s3 + $0x38] sm:$0xff] %vm185, %v337
  %354 = vst.msk [vmem:[%s3 + $0x40] sm:$0xff] %vm185, %v338
  %355 = vst.msk [vmem:[%s3 + $0x48] sm:$0xff] %vm185, %v339
  %356 = vst.msk [vmem:[%s3 + $0x50] sm:$0xff] %vm185, %v340
  %357 = vst.msk [vmem:[%s3 + $0x58] sm:$0xff] %vm185, %v341
  %358 = vst.msk [vmem:[%s3 + $0x60] sm:$0xff] %vm185, %v342
  %359 = vst.msk [vmem:[%s3 + $0x68] sm:$0xff] %vm185, %v343
  %360 = vst.msk [vmem:[%s3 + $0x70] sm:$0xff] %vm185, %v344
  %361 = vst.msk [vmem:[%s3 + $0x78] sm:$0xff] %vm185, %v345
  // Predicated region
  $region14: #{complex_conv_pool.1} parent=0 // pred_check
    _
  $region15: #{complex_conv_pool.1} parent=0 // pred_check_branch
    %363 = sbr.rel (0) target = $region17
  $region16: #{complex_conv_pool.1} parent=0 // pred_region
    _
  $region17: #{complex_conv_pool.1} parent=0 // pred_fallthru
    _
  // Predicated region
  $region18: #{complex_conv_pool.1} parent=0 // pred_check
    _
  $region19: #{complex_conv_pool.1} parent=0 // pred_check_branch
    %365 = sbr.rel (0) target = $region21
  $region20: #{complex_conv_pool.1} parent=0 // pred_region
    _
  $region21: #{complex_conv_pool.1} parent=0 // pred_fallthru
    _

</llo_original>
